<compile_context>
chip_gen: v5e
topology: v5e:2x2
jax: 0.10.0
libtpu: 0.0.40
codegen_flags: <defaults>
</compile_context>

<pallas_src>
import functools

import jax
import jax.numpy as jnp
from jax.experimental import pallas as pl
from jax.experimental.pallas import tpu as pltpu

_LANE = 128
_SUBLANE = 8
_MiB = 1024 * 1024


def _round_up(x, m):
    return ((x + m - 1) // m) * m


def _mlp_kernel(*refs, num_layers):
    """Fused MLP: all layers computed on one row-tile kept in VMEM/vregs."""
    x_ref = refs[0]
    o_ref = refs[-1]
    param_refs = refs[1:-1]  # (w0, b0, w1, b1, ..., wL, bL)

    # Elementwise math (bias add, ReLU) stays f32; cast only at the MXU
    # operand so the matmul takes the fast bf16 path with f32 accumulation.
    h = x_ref[...].astype(jnp.float32)
    for i in range(num_layers):
        w = param_refs[2 * i][...]        # bf16 (cast once in the wrapper)
        b = param_refs[2 * i + 1][...]    # f32
        h = jnp.dot(h.astype(w.dtype), w, preferred_element_type=jnp.float32) + b
        if i < num_layers - 1:
            h = jnp.maximum(h, 0.0)       # hidden layers: activation='relu'
        # last layer: last_activation='none'
    o_ref[...] = h.astype(o_ref.dtype)


def feedforward_nn_pallas(x, weights, biases, *, tile_m=1024,
                          mxu_dtype=jnp.bfloat16, pad_input_features=False):
    """FeedForwardNN forward pass (default config) via one fused Pallas kernel.

    x:        [..., Din]
    weights:  list of [Din_i, Dout_i] arrays
    biases:   list of [1, Dout_i] arrays
    tile_m:   requested row tile (clamped by the VMEM budget / row count)
    returns:  [..., Dout_last]
    """
    num_layers = len(weights)
    assert len(biases) == num_layers

    orig_lead = x.shape[:-1]
    in_dim = x.shape[-1]
    out_dim = weights[-1].shape[-1]
    assert weights[0].shape[0] == in_dim

    x2 = x.reshape(-1, in_dim)
    n = x2.shape[0]

    # ---- Lane padding of feature dims (exact: padded channels stay 0). ----
    dims = [in_dim] + [w.shape[1] for w in weights]
    dims_pad = [_round_up(d, _LANE) for d in dims]
    if not pad_input_features:
        # Keep the HBM row stream at its true width; an unpadded K on the
        # first matmul is far cheaper than inflating the input traffic.
        dims_pad[0] = in_dim
    elif dims_pad[0] != in_dim:
        x2 = jnp.pad(x2, ((0, 0), (0, dims_pad[0] - in_dim)))

    padded_w, padded_b = [], []
    for i, (w, b) in enumerate(zip(weights, biases)):
        din_p, dout_p = dims_pad[i], dims_pad[i + 1]
        if w.shape != (din_p, dout_p):
            w = jnp.pad(w, ((0, din_p - w.shape[0]), (0, dout_p - w.shape[1])))
        if b.shape[-1] != dout_p:
            b = jnp.pad(b, ((0, 0), (0, dout_p - b.shape[-1])))
        # Cast weights to the MXU dtype ONCE here (not per grid step).
        padded_w.append(w.astype(mxu_dtype))
        padded_b.append(b.astype(jnp.float32))

    din_pad = dims_pad[0]
    dout_pad = dims_pad[-1]
    x_bytes = x2.dtype.itemsize
    out_bytes = jnp.dtype(x.dtype).itemsize
    w_bytes = jnp.dtype(mxu_dtype).itemsize

    # ---- VMEM budget (v7x has only 64 MiB/TC; keep headroom). ----
    try:
        vmem_cap = int(pltpu.get_tpu_info().vmem_capacity_bytes)
    except Exception:
        vmem_cap = 64 * _MiB  # safe minimum across v5e/v6e/v7x
    budget = int(0.70 * vmem_cap)
    w_total = sum(w.size * w_bytes for w in padded_w)     # single-buffered
    b_total = sum(b.size * 4 for b in padded_b)
    fixed = w_total + b_total
    per_row = (2 * din_pad * x_bytes          # input tile, double-buffered
               + 2 * dout_pad * out_bytes     # output tile, double-buffered
               + 2 * max(dims_pad) * 4)       # ~2 live f32 activation tiles
    # If `fixed` alone exceeds the budget, the resident-weights design no
    # longer applies: split into one pallas_call per layer or stream K-tiles
    # with pltpu.emit_pipeline instead (not needed for this module's demo).
    tile_budget = max(_SUBLANE,
                      ((budget - fixed) // max(per_row, 1)) // _SUBLANE * _SUBLANE)

    tile_m_eff = min(tile_m, tile_budget)
    if n > _SUBLANE:
        # Guarantee >=2 grid steps so the "parallel" row axis can be split
        # across v7x's two TensorCores (megacore).
        tile_m_eff = min(tile_m_eff, _round_up(-(-n // 2), _SUBLANE))
    tile_m_eff = min(tile_m_eff, _round_up(n, _SUBLANE))
    tile_m_eff = max(_SUBLANE, _round_up(tile_m_eff, _SUBLANE))

    grid = (pl.cdiv(n, tile_m_eff),)   # partial last block handled by Pallas

    footprint = fixed + per_row * tile_m_eff
    vmem_limit = int(min(int(0.9 * vmem_cap),
                         max(32 * _MiB, int(1.5 * footprint))))

    kernel = functools.partial(_mlp_kernel, num_layers=num_layers)
    params = []
    for w, b in zip(padded_w, padded_b):
        params += [w, b]

    def build(single_buffer_params):
        in_specs = [pl.BlockSpec((tile_m_eff, din_pad), lambda i: (i, 0))]
        for w, b in zip(padded_w, padded_b):
            if single_buffer_params:
                # Constant index_map -> VMEM-resident across all grid steps;
                # Buffered(1) avoids double-buffering blocks that never change.
                in_specs.append(pl.BlockSpec(w.shape, lambda i: (0, 0),
                                             pipeline_mode=pl.Buffered(1)))
                in_specs.append(pl.BlockSpec(b.shape, lambda i: (0, 0),
                                             pipeline_mode=pl.Buffered(1)))
            else:
                in_specs.append(pl.BlockSpec(w.shape, lambda i: (0, 0)))
                in_specs.append(pl.BlockSpec(b.shape, lambda i: (0, 0)))
        out_spec = pl.BlockSpec((tile_m_eff, dout_pad), lambda i: (i, 0))
        return pl.pallas_call(
            kernel,
            grid=grid,
            in_specs=in_specs,
            out_specs=out_spec,
            out_shape=jax.ShapeDtypeStruct((n, dout_pad), x.dtype),
            compiler_params=pltpu.CompilerParams(
                dimension_semantics=("parallel",),
                vmem_limit_bytes=vmem_limit,
            ),
        )

    try:
        out = build(single_buffer_params=True)(x2, *params)
    except Exception:
        # Fallback for jax versions where pipeline_mode on pallas_call
        # BlockSpecs is not supported; only costs 2x VMEM on the weights.
        out = build(single_buffer_params=False)(x2, *params)

    out = out[:, :out_dim]
    return out.reshape(orig_lead + (out_dim,))


def init_params(key, full_dims):
    """Deterministic init mimicking nn.Linear defaults (uniform +/- 1/sqrt(fan_in))."""
    weights, biases = [], []
    for din, dout in zip(full_dims[:-1], full_dims[1:]):
        key, kw, kb = jax.random.split(key, 3)
        bound = 1.0 / jnp.sqrt(float(din))
        weights.append(jax.random.uniform(kw, (din, dout), jnp.float32, -bound, bound))
        biases.append(jax.random.uniform(kb, (1, dout), jnp.float32, -bound, bound))
    return weights, biases


def reference_forward(x, weights, biases, mxu_dtype=None):
    """Pure-JAX reference of FeedForwardNN.forward (default config).

    mxu_dtype=None      -> full f32 math (module semantics).
    mxu_dtype=bfloat16  -> same cast-at-dot / f32-accumulate recipe as kernel.
    """
    h = x.astype(jnp.float32)
    for i, (w, b) in enumerate(zip(weights, biases)):
        if mxu_dtype is not None:
            hw = jnp.dot(h.astype(mxu_dtype), w.astype(mxu_dtype),
                         preferred_element_type=jnp.float32)
        else:
            hw = jnp.dot(h, w, preferred_element_type=jnp.float32)
        h = hw + b.astype(jnp.float32)
        if i < len(weights) - 1:
            h = jnp.maximum(h, 0.0)
    return h.astype(x.dtype)


if __name__ == "__main__":
    # FeedForwardNN(in_dim=16, out_dim=8, hidden_dims=32, depth=3,
    #               activation='relu', last_activation='none', ...)
    in_dim, out_dim = 16, 8
    hidden_dims = [32, 32]          # depth = 3
    full_dims = [in_dim] + hidden_dims + [out_dim]

    key = jax.random.PRNGKey(0)
    key, kx = jax.random.split(key)
    # n = 3*5 = 15 rows: not a multiple of the row tile -> exercises the
    # partial last block and a multi-step (megacore-splittable) grid.
    x = jax.random.normal(kx, (3, 5, in_dim), jnp.float32)  # [..., Din]

    weights, biases = init_params(key, full_dims)

    out = feedforward_nn_pallas(x, weights, biases)
    out = jax.block_until_ready(out)
    assert out.shape == (3, 5, out_dim), out.shape

    # Matched-precision reference (bf16 operands, f32 accumulation).
    ref_bf16 = reference_forward(x, weights, biases, mxu_dtype=jnp.bfloat16)
    assert jnp.allclose(out, ref_bf16, atol=5e-3, rtol=5e-3), float(
        jnp.max(jnp.abs(out - ref_bf16)))

    # Full-f32 module semantics (loose tolerance for the bf16 MXU path).
    ref_f32 = reference_forward(x, weights, biases)
    assert jnp.allclose(out, ref_f32, atol=5e-2, rtol=5e-2), float(
        jnp.max(jnp.abs(out - ref_f32)))

    print("KERNEL_OK")
</pallas_src>

<mosaic_0001>
module attributes {stable_mosaic.version = 11 : i64} {
  func.func @_mlp_kernel(%arg0: i32, %arg1: memref<8x16xf32, #tpu.memory_space<vmem>>, %arg2: memref<16x128xbf16, #tpu.memory_space<vmem>>, %arg3: memref<1x128xf32, #tpu.memory_space<vmem>>, %arg4: memref<128x128xbf16, #tpu.memory_space<vmem>>, %arg5: memref<1x128xf32, #tpu.memory_space<vmem>>, %arg6: memref<128x128xbf16, #tpu.memory_space<vmem>>, %arg7: memref<1x128xf32, #tpu.memory_space<vmem>>, %arg8: memref<8x128xf32, #tpu.memory_space<vmem>>) attributes {dimension_semantics = [#tpu.dimension_semantics<parallel>], iteration_bounds = array<i64: 2>, scalar_prefetch = 0 : i64, scratch_operands = 0 : i64, tpu.core_type = #tpu.core_type<tc>, window_params = [{transform_indices = @transform_0, window_bounds = array<i64: 8, 16>}, {pipeline_mode = #tpu.pipeline_mode<synchronous>, transform_indices = @transform_1, window_bounds = array<i64: 16, 128>}, {pipeline_mode = #tpu.pipeline_mode<synchronous>, transform_indices = @transform_2, window_bounds = array<i64: 1, 128>}, {pipeline_mode = #tpu.pipeline_mode<synchronous>, transform_indices = @transform_3, window_bounds = array<i64: 128, 128>}, {pipeline_mode = #tpu.pipeline_mode<synchronous>, transform_indices = @transform_4, window_bounds = array<i64: 1, 128>}, {pipeline_mode = #tpu.pipeline_mode<synchronous>, transform_indices = @transform_5, window_bounds = array<i64: 128, 128>}, {pipeline_mode = #tpu.pipeline_mode<synchronous>, transform_indices = @transform_6, window_bounds = array<i64: 1, 128>}, {transform_indices = @transform_7, window_bounds = array<i64: 8, 128>}]} {
    %c0 = arith.constant 0 : index
    %c0_0 = arith.constant 0 : index
    %0 = vector.load %arg1[%c0, %c0_0] : memref<8x16xf32, #tpu.memory_space<vmem>>, vector<8x16xf32>
    %c0_1 = arith.constant 0 : index
    %c0_2 = arith.constant 0 : index
    %1 = vector.load %arg2[%c0_1, %c0_2] : memref<16x128xbf16, #tpu.memory_space<vmem>>, vector<16x128xbf16>
    %c0_3 = arith.constant 0 : index
    %c0_4 = arith.constant 0 : index
    %2 = vector.load %arg3[%c0_3, %c0_4] : memref<1x128xf32, #tpu.memory_space<vmem>>, vector<1x128xf32>
    %3 = arith.truncf %0 : vector<8x16xf32> to vector<8x16xbf16>
    %cst = arith.constant dense<0.000000e+00> : vector<8x128xf32>
    %4 = tpu.matmul %3, %1, %cst {dimension_numbers = #tpu.dot_dimension_numbers<[1], [0], [0], [1], [0, 0, 1, 1], [], []>} : vector<8x16xbf16>, vector<16x128xbf16>, vector<8x128xf32> -> vector<8x128xf32>
    %5 = vector.broadcast %2 : vector<1x128xf32> to vector<8x128xf32>
    %6 = arith.addf %4, %5 : vector<8x128xf32>
    %cst_5 = arith.constant 0.000000e+00 : f32
    %7 = vector.broadcast %cst_5 : f32 to vector<8x128xf32>
    %8 = arith.maximumf %6, %7 : vector<8x128xf32>
    %c0_6 = arith.constant 0 : index
    %c0_7 = arith.constant 0 : index
    %9 = vector.load %arg4[%c0_6, %c0_7] : memref<128x128xbf16, #tpu.memory_space<vmem>>, vector<128x128xbf16>
    %c0_8 = arith.constant 0 : index
    %c0_9 = arith.constant 0 : index
    %10 = vector.load %arg5[%c0_8, %c0_9] : memref<1x128xf32, #tpu.memory_space<vmem>>, vector<1x128xf32>
    %11 = arith.truncf %8 : vector<8x128xf32> to vector<8x128xbf16>
    %cst_10 = arith.constant dense<0.000000e+00> : vector<8x128xf32>
    %12 = tpu.matmul %11, %9, %cst_10 {dimension_numbers = #tpu.dot_dimension_numbers<[1], [0], [0], [1], [0, 0, 1, 1], [], []>} : vector<8x128xbf16>, vector<128x128xbf16>, vector<8x128xf32> -> vector<8x128xf32>
    %13 = vector.broadcast %10 : vector<1x128xf32> to vector<8x128xf32>
    %14 = arith.addf %12, %13 : vector<8x128xf32>
    %cst_11 = arith.constant 0.000000e+00 : f32
    %15 = vector.broadcast %cst_11 : f32 to vector<8x128xf32>
    %16 = arith.maximumf %14, %15 : vector<8x128xf32>
    %c0_12 = arith.constant 0 : index
    %c0_13 = arith.constant 0 : index
    %17 = vector.load %arg6[%c0_12, %c0_13] : memref<128x128xbf16, #tpu.memory_space<vmem>>, vector<128x128xbf16>
    %c0_14 = arith.constant 0 : index
    %c0_15 = arith.constant 0 : index
    %18 = vector.load %arg7[%c0_14, %c0_15] : memref<1x128xf32, #tpu.memory_space<vmem>>, vector<1x128xf32>
    %19 = arith.truncf %16 : vector<8x128xf32> to vector<8x128xbf16>
    %cst_16 = arith.constant dense<0.000000e+00> : vector<8x128xf32>
    %20 = tpu.matmul %19, %17, %cst_16 {dimension_numbers = #tpu.dot_dimension_numbers<[1], [0], [0], [1], [0, 0, 1, 1], [], []>} : vector<8x128xbf16>, vector<128x128xbf16>, vector<8x128xf32> -> vector<8x128xf32>
    %21 = vector.broadcast %18 : vector<1x128xf32> to vector<8x128xf32>
    %22 = arith.addf %20, %21 : vector<8x128xf32>
    %c0_17 = arith.constant 0 : index
    %c0_18 = arith.constant 0 : index
    %23 = vector.load %arg8[%c0_17, %c0_18] : memref<8x128xf32, #tpu.memory_space<vmem>>, vector<8x128xf32>
    tpu.vector_store %arg8[%c0_17, %c0_18], %22 {strides = array<i32>} : memref<8x128xf32, #tpu.memory_space<vmem>>, vector<8x128xf32>,
    return
  }
  func.func @transform_0(%arg0: i32) -> (i32, i32) {
    %c0_i32 = arith.constant 0 : i32
    %c0_i32_0 = arith.constant 0 : i32
    return %arg0, %c0_i32 : i32, i32
  }
  func.func @transform_1(%arg0: i32) -> (i32, i32) {
    %c0_i32 = arith.constant 0 : i32
    %c0_i32_0 = arith.constant 0 : i32
    %c0_i32_1 = arith.constant 0 : i32
    return %c0_i32, %c0_i32_0 : i32, i32
  }
  func.func @transform_2(%arg0: i32) -> (i32, i32) {
    %c0_i32 = arith.constant 0 : i32
    %c0_i32_0 = arith.constant 0 : i32
    %c0_i32_1 = arith.constant 0 : i32
    return %c0_i32, %c0_i32_0 : i32, i32
  }
  func.func @transform_3(%arg0: i32) -> (i32, i32) {
    %c0_i32 = arith.constant 0 : i32
    %c0_i32_0 = arith.constant 0 : i32
    %c0_i32_1 = arith.constant 0 : i32
    return %c0_i32, %c0_i32_0 : i32, i32
  }
  func.func @transform_4(%arg0: i32) -> (i32, i32) {
    %c0_i32 = arith.constant 0 : i32
    %c0_i32_0 = arith.constant 0 : i32
    %c0_i32_1 = arith.constant 0 : i32
    return %c0_i32, %c0_i32_0 : i32, i32
  }
  func.func @transform_5(%arg0: i32) -> (i32, i32) {
    %c0_i32 = arith.constant 0 : i32
    %c0_i32_0 = arith.constant 0 : i32
    %c0_i32_1 = arith.constant 0 : i32
    return %c0_i32, %c0_i32_0 : i32, i32
  }
  func.func @transform_6(%arg0: i32) -> (i32, i32) {
    %c0_i32 = arith.constant 0 : i32
    %c0_i32_0 = arith.constant 0 : i32
    %c0_i32_1 = arith.constant 0 : i32
    return %c0_i32, %c0_i32_0 : i32, i32
  }
  func.func @transform_7(%arg0: i32) -> (i32, i32) {
    %c0_i32 = arith.constant 0 : i32
    %c0_i32_0 = arith.constant 0 : i32
    return %arg0, %c0_i32 : i32, i32
  }
}

module attributes {stable_mosaic.version = 11 : i64} {
  func.func @_mlp_kernel(%arg0: i32, %arg1: memref<8x16xf32, #tpu.memory_space<vmem>>, %arg2: memref<16x128xbf16, #tpu.memory_space<vmem>>, %arg3: memref<1x128xf32, #tpu.memory_space<vmem>>, %arg4: memref<128x128xbf16, #tpu.memory_space<vmem>>, %arg5: memref<1x128xf32, #tpu.memory_space<vmem>>, %arg6: memref<128x128xbf16, #tpu.memory_space<vmem>>, %arg7: memref<1x128xf32, #tpu.memory_space<vmem>>, %arg8: memref<8x128xf32, #tpu.memory_space<vmem>>) attributes {dimension_semantics = [#tpu.dimension_semantics<parallel>], iteration_bounds = array<i64: 2>, scalar_prefetch = 0 : i64, scratch_operands = 0 : i64, tpu.core_type = #tpu.core_type<tc>, window_params = [{transform_indices = @transform_0, window_bounds = array<i64: 8, 16>}, {pipeline_mode = #tpu.pipeline_mode<synchronous>, transform_indices = @transform_1, window_bounds = array<i64: 16, 128>}, {pipeline_mode = #tpu.pipeline_mode<synchronous>, transform_indices = @transform_2, window_bounds = array<i64: 1, 128>}, {pipeline_mode = #tpu.pipeline_mode<synchronous>, transform_indices = @transform_3, window_bounds = array<i64: 128, 128>}, {pipeline_mode = #tpu.pipeline_mode<synchronous>, transform_indices = @transform_4, window_bounds = array<i64: 1, 128>}, {pipeline_mode = #tpu.pipeline_mode<synchronous>, transform_indices = @transform_5, window_bounds = array<i64: 128, 128>}, {pipeline_mode = #tpu.pipeline_mode<synchronous>, transform_indices = @transform_6, window_bounds = array<i64: 1, 128>}, {transform_indices = @transform_7, window_bounds = array<i64: 8, 128>}]} {
    %c0 = arith.constant 0 : index
    %c0_0 = arith.constant 0 : index
    %0 = vector.load %arg1[%c0, %c0_0] : memref<8x16xf32, #tpu.memory_space<vmem>>, vector<8x16xf32>
    %c0_1 = arith.constant 0 : index
    %c0_2 = arith.constant 0 : index
    %1 = vector.load %arg2[%c0_1, %c0_2] : memref<16x128xbf16, #tpu.memory_space<vmem>>, vector<16x128xbf16>
    %c0_3 = arith.constant 0 : index
    %c0_4 = arith.constant 0 : index
    %2 = vector.load %arg3[%c0_3, %c0_4] : memref<1x128xf32, #tpu.memory_space<vmem>>, vector<1x128xf32>
    %3 = arith.truncf %0 : vector<8x16xf32> to vector<8x16xbf16>
    %cst = arith.constant dense<0.000000e+00> : vector<8x128xf32>
    %4 = tpu.matmul %3, %1, %cst {dimension_numbers = #tpu.dot_dimension_numbers<[1], [0], [0], [1], [0, 0, 1, 1], [], []>} : vector<8x16xbf16>, vector<16x128xbf16>, vector<8x128xf32> -> vector<8x128xf32>
    %5 = vector.broadcast %2 : vector<1x128xf32> to vector<8x128xf32>
    %6 = arith.addf %4, %5 : vector<8x128xf32>
    %cst_5 = arith.constant 0.000000e+00 : f32
    %7 = vector.broadcast %cst_5 : f32 to vector<8x128xf32>
    %8 = arith.maximumf %6, %7 : vector<8x128xf32>
    %c0_6 = arith.constant 0 : index
    %c0_7 = arith.constant 0 : index
    %9 = vector.load %arg4[%c0_6, %c0_7] : memref<128x128xbf16, #tpu.memory_space<vmem>>, vector<128x128xbf16>
    %c0_8 = arith.constant 0 : index
    %c0_9 = arith.constant 0 : index
    %10 = vector.load %arg5[%c0_8, %c0_9] : memref<1x128xf32, #tpu.memory_space<vmem>>, vector<1x128xf32>
    %11 = arith.truncf %8 : vector<8x128xf32> to vector<8x128xbf16>
    %cst_10 = arith.constant dense<0.000000e+00> : vector<8x128xf32>
    %12 = tpu.matmul %11, %9, %cst_10 {dimension_numbers = #tpu.dot_dimension_numbers<[1], [0], [0], [1], [0, 0, 1, 1], [], []>} : vector<8x128xbf16>, vector<128x128xbf16>, vector<8x128xf32> -> vector<8x128xf32>
    %13 = vector.broadcast %10 : vector<1x128xf32> to vector<8x128xf32>
    %14 = arith.addf %12, %13 : vector<8x128xf32>
    %cst_11 = arith.constant 0.000000e+00 : f32
    %15 = vector.broadcast %cst_11 : f32 to vector<8x128xf32>
    %16 = arith.maximumf %14, %15 : vector<8x128xf32>
    %c0_12 = arith.constant 0 : index
    %c0_13 = arith.constant 0 : index
    %17 = vector.load %arg6[%c0_12, %c0_13] : memref<128x128xbf16, #tpu.memory_space<vmem>>, vector<128x128xbf16>
    %c0_14 = arith.constant 0 : index
    %c0_15 = arith.constant 0 : index
    %18 = vector.load %arg7[%c0_14, %c0_15] : memref<1x128xf32, #tpu.memory_space<vmem>>, vector<1x128xf32>
    %19 = arith.truncf %16 : vector<8x128xf32> to vector<8x128xbf16>
    %cst_16 = arith.constant dense<0.000000e+00> : vector<8x128xf32>
    %20 = tpu.matmul %19, %17, %cst_16 {dimension_numbers = #tpu.dot_dimension_numbers<[1], [0], [0], [1], [0, 0, 1, 1], [], []>} : vector<8x128xbf16>, vector<128x128xbf16>, vector<8x128xf32> -> vector<8x128xf32>
    %21 = vector.broadcast %18 : vector<1x128xf32> to vector<8x128xf32>
    %22 = arith.addf %20, %21 : vector<8x128xf32>
    %c0_17 = arith.constant 0 : index
    %c0_18 = arith.constant 0 : index
    %23 = vector.load %arg8[%c0_17, %c0_18] : memref<8x128xf32, #tpu.memory_space<vmem>>, vector<8x128xf32>
    tpu.vector_store %arg8[%c0_17, %c0_18], %22 {strides = array<i32>} : memref<8x128xf32, #tpu.memory_space<vmem>>, vector<8x128xf32>,
    return
  }
  func.func @transform_0(%arg0: i32) -> (i32, i32) {
    %c0_i32 = arith.constant 0 : i32
    %c0_i32_0 = arith.constant 0 : i32
    return %arg0, %c0_i32 : i32, i32
  }
  func.func @transform_1(%arg0: i32) -> (i32, i32) {
    %c0_i32 = arith.constant 0 : i32
    %c0_i32_0 = arith.constant 0 : i32
    %c0_i32_1 = arith.constant 0 : i32
    return %c0_i32, %c0_i32_0 : i32, i32
  }
  func.func @transform_2(%arg0: i32) -> (i32, i32) {
    %c0_i32 = arith.constant 0 : i32
    %c0_i32_0 = arith.constant 0 : i32
    %c0_i32_1 = arith.constant 0 : i32
    return %c0_i32, %c0_i32_0 : i32, i32
  }
  func.func @transform_3(%arg0: i32) -> (i32, i32) {
    %c0_i32 = arith.constant 0 : i32
    %c0_i32_0 = arith.constant 0 : i32
    %c0_i32_1 = arith.constant 0 : i32
    return %c0_i32, %c0_i32_0 : i32, i32
  }
  func.func @transform_4(%arg0: i32) -> (i32, i32) {
    %c0_i32 = arith.constant 0 : i32
    %c0_i32_0 = arith.constant 0 : i32
    %c0_i32_1 = arith.constant 0 : i32
    return %c0_i32, %c0_i32_0 : i32, i32
  }
  func.func @transform_5(%arg0: i32) -> (i32, i32) {
    %c0_i32 = arith.constant 0 : i32
    %c0_i32_0 = arith.constant 0 : i32
    %c0_i32_1 = arith.constant 0 : i32
    return %c0_i32, %c0_i32_0 : i32, i32
  }
  func.func @transform_6(%arg0: i32) -> (i32, i32) {
    %c0_i32 = arith.constant 0 : i32
    %c0_i32_0 = arith.constant 0 : i32
    %c0_i32_1 = arith.constant 0 : i32
    return %c0_i32, %c0_i32_0 : i32, i32
  }
  func.func @transform_7(%arg0: i32) -> (i32, i32) {
    %c0_i32 = arith.constant 0 : i32
    %c0_i32_0 = arith.constant 0 : i32
    return %arg0, %c0_i32 : i32, i32
  }
}

</mosaic_0001>

<llo_original>
// kernel: tpu_custom_call.1
$region0: #{tpu_custom_call.1}
  #allocation0 [shape = 'u32[]', space=smem, size = 0x4, offset = 0x4, fixed_abs, tag = 'smem constant byte address 0x4 - core index']
  #allocation1 [shape = 'u32[72,128]{1,0:T(1,128)}', space=vmem, size = 0x9000, scoped, tag = 'internal scratch']
  %s0 = inlined_call_operand.hbm [shape: f32[15,16], index: 0, kind: input, shape index: {}]
  %s1 = inlined_call_operand.hbm [shape: bf16[16,128], index: 1, kind: input, shape index: {}]
  %s2 = inlined_call_operand.vmem [shape: f32[1,128], index: 2, kind: input, shape index: {}]
  %s3 = inlined_call_operand.hbm [shape: bf16[128,128], index: 3, kind: input, shape index: {}]
  %s4 = inlined_call_operand.vmem [shape: f32[1,128], index: 4, kind: input, shape index: {}]
  %s5 = inlined_call_operand.hbm [shape: bf16[128,128], index: 5, kind: input, shape index: {}]
  %s6 = inlined_call_operand.vmem [shape: f32[1,128], index: 6, kind: input, shape index: {}]
  %s7 = inlined_call_operand.hbm [shape: f32[15,128], index: 7, kind: output, shape index: {}]
  %s8 = sld [smem:[#allocation0]]
  $region77: #{tpu_custom_call.1} parent=0
    _
  %s10 = ssub.s32 1, %s8
  %s11 = scalar_select 0, %s10, %s8
  $region1: #{tpu_custom_call.1} parent=0
    #allocation2 [shape = 'u8[8192]{0}', space=vmem, size = 0x2000, scoped, tag = 'input window, operand 0']
    #allocation3 [shape = 's32[2]{0}', space=sflag, size = 0x8, scoped, tag = 'scoped memory for tpu_custom_call.1']
    #allocation4 [shape = 's32[2]{0}', space=sflag, size = 0x8, scoped, tag = 'scoped memory for tpu_custom_call.1']
    #allocation5 [shape = 'u8[4096]{0}', space=vmem, size = 0x1000, scoped, tag = 'input window, operand 1, single buffered']
    #allocation6 [shape = 's32[1]{0}', space=sflag, size = 0x4, scoped, tag = 'scoped memory for tpu_custom_call.1']
    #allocation7 [shape = 'u8[32768]{0}', space=vmem, size = 0x8000, scoped, tag = 'input window, operand 3, single buffered']
    #allocation8 [shape = 'u8[32768]{0}', space=vmem, size = 0x8000, scoped, tag = 'input window, operand 5, single buffered']
    #allocation9 [shape = 's32[1]{0}', space=sflag, size = 0x4, scoped, tag = 'scoped memory for tpu_custom_call.1']
    #allocation10 [shape = 'u8[8192]{0}', space=vmem, size = 0x2000, scoped, tag = 'output window, operand 0']
    %12 = vsyncpa [#allocation3], 0
    %s13 = scalar_lea.sflag [#allocation3], 1
    %14 = vsyncpa %s13, 0
    %15 = vsyncpa [#allocation6], 0
    %16 = vsyncpa [#allocation9], 0
    %17 = vsyncpa [#allocation4], 0
    %s18 = scalar_lea.sflag [#allocation4], 1
    %19 = vsyncpa %s18, 0
    loop: start=0, step=1, limit=4
    $region2: #{tpu_custom_call.1} parent=1 // loop_pre_header
      _
    $region3: #{tpu_custom_call.1} parent=1 // loop_header
      %s21 = sphi 0, %s25
      %p22 = scmp.ge.s32.totalorder %s21, 4
      %s31 = sphi 0, %s33
      %s34 = sphi 0, %s31
      %s35 = sphi 0, %s34
      %s51 = sphi 0, %s35
      %s55 = sphi 0, %s55
      %s57 = sphi 0, %s55
      %s58 = sphi 0, %s57
      %s72 = sphi 0, %s58
      %s76 = sphi 0, %s76
      %s78 = sphi 0, %s76
      %s79 = sphi 0, %s78
      %s93 = sphi 0, %s79
      %s97 = sphi 0, %s97
      %s99 = sphi 0, %s97
      %s100 = sphi 0, %s99
      %s114 = sphi 0, %s100
      %s118 = sphi 0, %s118
      %s120 = sphi 0, %s118
      %s121 = sphi 0, %s120
      %s135 = sphi 0, %s121
      %s139 = sphi 0, %s139
      %s141 = sphi 0, %s139
      %s142 = sphi 0, %s141
      %s156 = sphi 0, %s142
      %s160 = sphi 0, %s160
      %s162 = sphi 0, %s160
      %s163 = sphi 0, %s162
      %s177 = sphi 0, %s163
      %s183 = sphi 0, %s185
      %s186 = sphi 0, %s183
      %s187 = sphi 0, %s186
      %s203 = sphi 0, %s187
    $region4: #{tpu_custom_call.1} parent=1 // loop_header_branch
      %24 = sbr.rel (%p22) target = $region8
    $region5: #{tpu_custom_call.1} parent=1 // loop_body
      %s26 = ssub.s32 %s21, 1
      %s27 = ssub.s32 %s21, 2
      %s28 = sadd.s32 %s21, 1
      %s29 = ssub.s32 %s21, %s28
      %p30 = scmp.eq.s32.totalorder %s29, 0
      %s32 = sadd.s32 %s31, 1
      %s33 = scalar_select %p30, %s31, %s32
      %p36 = pneg %p30
      %p37 = scmp.eq.s32.totalorder %s21, 1
      %p38 = por %p36, %p37
      %p39 = scmp.ne.s32.totalorder %s31, %s34
      %p40 = scmp.eq.s32.totalorder %s21, 0
      %p41 = por %p39, %p40
      %p42 = scmp.ne.s32.totalorder %s31, %s34
      %p43 = scmp.eq.s32.totalorder %s26, 1
      %p44 = por %p42, %p43
      %p45 = scmp.ne.s32.totalorder %s34, %s35
      %p46 = scmp.eq.s32.totalorder %s26, 0
      %p47 = por %p45, %p46
      %p48 = scmp.ne.s32.totalorder %s34, %s35
      %p49 = scmp.eq.s32.totalorder %s27, 1
      %p50 = por %p48, %p49
      %p52 = scmp.ne.s32.totalorder %s35, %s51
      %p53 = scmp.eq.s32.totalorder %s27, 0
      %p54 = por %p52, %p53
      %s56 = sadd.s32 %s55, 1
      %p59 = scmp.eq.s32.totalorder %s21, 1
      %p60 = scmp.ne.s32.totalorder %s55, %s57
      %p61 = scmp.eq.s32.totalorder %s21, 0
      %p62 = por %p60, %p61
      %p63 = scmp.ne.s32.totalorder %s55, %s57
      %p64 = scmp.eq.s32.totalorder %s26, 1
      %p65 = por %p63, %p64
      %p66 = scmp.ne.s32.totalorder %s57, %s58
      %p67 = scmp.eq.s32.totalorder %s26, 0
      %p68 = por %p66, %p67
      %p69 = scmp.ne.s32.totalorder %s57, %s58
      %p70 = scmp.eq.s32.totalorder %s27, 1
      %p71 = por %p69, %p70
      %p73 = scmp.ne.s32.totalorder %s58, %s72
      %p74 = scmp.eq.s32.totalorder %s27, 0
      %p75 = por %p73, %p74
      %s77 = sadd.s32 %s76, 1
      %p80 = scmp.eq.s32.totalorder %s21, 1
      %p81 = scmp.ne.s32.totalorder %s76, %s78
      %p82 = scmp.eq.s32.totalorder %s21, 0
      %p83 = por %p81, %p82
      %p84 = scmp.ne.s32.totalorder %s76, %s78
      %p85 = scmp.eq.s32.totalorder %s26, 1
      %p86 = por %p84, %p85
      %p87 = scmp.ne.s32.totalorder %s78, %s79
      %p88 = scmp.eq.s32.totalorder %s26, 0
      %p89 = por %p87, %p88
      %p90 = scmp.ne.s32.totalorder %s78, %s79
      %p91 = scmp.eq.s32.totalorder %s27, 1
      %p92 = por %p90, %p91
      %p94 = scmp.ne.s32.totalorder %s79, %s93
      %p95 = scmp.eq.s32.totalorder %s27, 0
      %p96 = por %p94, %p95
      %s98 = sadd.s32 %s97, 1
      %p101 = scmp.eq.s32.totalorder %s21, 1
      %p102 = scmp.ne.s32.totalorder %s97, %s99
      %p103 = scmp.eq.s32.totalorder %s21, 0
      %p104 = por %p102, %p103
      %p105 = scmp.ne.s32.totalorder %s97, %s99
      %p106 = scmp.eq.s32.totalorder %s26, 1
      %p107 = por %p105, %p106
      %p108 = scmp.ne.s32.totalorder %s99, %s100
      %p109 = scmp.eq.s32.totalorder %s26, 0
      %p110 = por %p108, %p109
      %p111 = scmp.ne.s32.totalorder %s99, %s100
      %p112 = scmp.eq.s32.totalorder %s27, 1
      %p113 = por %p111, %p112
      %p115 = scmp.ne.s32.totalorder %s100, %s114
      %p116 = scmp.eq.s32.totalorder %s27, 0
      %p117 = por %p115, %p116
      %s119 = sadd.s32 %s118, 1
      %p122 = scmp.eq.s32.totalorder %s21, 1
      %p123 = scmp.ne.s32.totalorder %s118, %s120
      %p124 = scmp.eq.s32.totalorder %s21, 0
      %p125 = por %p123, %p124
      %p126 = scmp.ne.s32.totalorder %s118, %s120
      %p127 = scmp.eq.s32.totalorder %s26, 1
      %p128 = por %p126, %p127
      %p129 = scmp.ne.s32.totalorder %s120, %s121
      %p130 = scmp.eq.s32.totalorder %s26, 0
      %p131 = por %p129, %p130
      %p132 = scmp.ne.s32.totalorder %s120, %s121
      %p133 = scmp.eq.s32.totalorder %s27, 1
      %p134 = por %p132, %p133
      %p136 = scmp.ne.s32.totalorder %s121, %s135
      %p137 = scmp.eq.s32.totalorder %s27, 0
      %p138 = por %p136, %p137
      %s140 = sadd.s32 %s139, 1
      %p143 = scmp.eq.s32.totalorder %s21, 1
      %p144 = scmp.ne.s32.totalorder %s139, %s141
      %p145 = scmp.eq.s32.totalorder %s21, 0
      %p146 = por %p144, %p145
      %p147 = scmp.ne.s32.totalorder %s139, %s141
      %p148 = scmp.eq.s32.totalorder %s26, 1
      %p149 = por %p147, %p148
      %p150 = scmp.ne.s32.totalorder %s141, %s142
      %p151 = scmp.eq.s32.totalorder %s26, 0
      %p152 = por %p150, %p151
      %p153 = scmp.ne.s32.totalorder %s141, %s142
      %p154 = scmp.eq.s32.totalorder %s27, 1
      %p155 = por %p153, %p154
      %p157 = scmp.ne.s32.totalorder %s142, %s156
      %p158 = scmp.eq.s32.totalorder %s27, 0
      %p159 = por %p157, %p158
      %s161 = sadd.s32 %s160, 1
      %p164 = scmp.eq.s32.totalorder %s21, 1
      %p165 = scmp.ne.s32.totalorder %s160, %s162
      %p166 = scmp.eq.s32.totalorder %s21, 0
      %p167 = por %p165, %p166
      %p168 = scmp.ne.s32.totalorder %s160, %s162
      %p169 = scmp.eq.s32.totalorder %s26, 1
      %p170 = por %p168, %p169
      %p171 = scmp.ne.s32.totalorder %s162, %s163
      %p172 = scmp.eq.s32.totalorder %s26, 0
      %p173 = por %p171, %p172
      %p174 = scmp.ne.s32.totalorder %s162, %s163
      %p175 = scmp.eq.s32.totalorder %s27, 1
      %p176 = por %p174, %p175
      %p178 = scmp.ne.s32.totalorder %s163, %s177
      %p179 = scmp.eq.s32.totalorder %s27, 0
      %p180 = por %p178, %p179
      %s181 = ssub.s32 %s21, %s28
      %p182 = scmp.eq.s32.totalorder %s181, 0
      %s184 = sadd.s32 %s183, 1
      %s185 = scalar_select %p182, %s183, %s184
      %p188 = pneg %p182
      %p189 = scmp.eq.s32.totalorder %s21, 1
      %p190 = por %p188, %p189
      %p191 = scmp.ne.s32.totalorder %s183, %s186
      %p192 = scmp.eq.s32.totalorder %s21, 0
      %p193 = por %p191, %p192
      %p194 = scmp.ne.s32.totalorder %s183, %s186
      %p195 = scmp.eq.s32.totalorder %s26, 1
      %p196 = por %p194, %p195
      %p197 = scmp.ne.s32.totalorder %s186, %s187
      %p198 = scmp.eq.s32.totalorder %s26, 0
      %p199 = por %p197, %p198
      %p200 = scmp.ne.s32.totalorder %s186, %s187
      %p201 = scmp.eq.s32.totalorder %s27, 1
      %p202 = por %p200, %p201
      %p204 = scmp.ne.s32.totalorder %s187, %s203
      %p205 = scmp.eq.s32.totalorder %s27, 0
      %p206 = por %p204, %p205
      %p207 = scmp.le.s32.totalorder 1, %s21
      %p208 = scmp.lt.s32.totalorder %s21, 3
      %p209 = pnand %p207, %p208
      %p210 = pneg %p209
      // Predicated region
      $region9: #{tpu_custom_call.1} parent=5 // pred_check
        _
      $region10: #{tpu_custom_call.1} parent=5 // pred_check_branch
        %212 = sbr.rel (%p209) target = $region12
      $region11: #{tpu_custom_call.1} parent=5 // pred_region
        %s213 = ssub.s32 %s21, 1
        // Predicated region
        $region13: #{tpu_custom_call.1} parent=11 // pred_check
          %p214 = pneg %p68
        $region14: #{tpu_custom_call.1} parent=11 // pred_check_branch
          %216 = sbr.rel (%p214) target = $region16
        $region15: #{tpu_custom_call.1} parent=11 // pred_region
          %218 = vsyncadd [#allocation6], 0
          %s219 = sshll.u32 %s1, 4
          %s220 = int_to_ptr.hbm [resolvable:$true] %s219
          %s221 = sshll.u32 [#allocation5], 4
          %s222 = int_to_ptr.vmem [resolvable:$true] %s221
          %227 = dma.hbm_to_vmem [thread:$0]  %s220, 128, %s222, [#allocation6], 64, 64, 4
        $region16: #{tpu_custom_call.1} parent=11 // pred_fallthru
          _
        // Predicated region
        $region17: #{tpu_custom_call.1} parent=11 // pred_check
          %p228 = pneg %p89
        $region18: #{tpu_custom_call.1} parent=11 // pred_check_branch
          %230 = sbr.rel (%p228) target = $region20
        $region19: #{tpu_custom_call.1} parent=11 // pred_region
          _
        $region20: #{tpu_custom_call.1} parent=11 // pred_fallthru
          _
        // Predicated region
        $region21: #{tpu_custom_call.1} parent=11 // pred_check
          %p231 = pneg %p110
        $region22: #{tpu_custom_call.1} parent=11 // pred_check_branch
          %233 = sbr.rel (%p231) target = $region24
        $region23: #{tpu_custom_call.1} parent=11 // pred_region
          %235 = vsyncadd [#allocation6], 0
          %s236 = sshll.u32 %s3, 4
          %s237 = int_to_ptr.hbm [resolvable:$true] %s236
          %s238 = sshll.u32 [#allocation7], 4
          %s239 = int_to_ptr.vmem [resolvable:$true] %s238
          %244 = dma.hbm_to_vmem [thread:$0]  %s237, 1024, %s239, [#allocation6], 64, 64, 4
        $region24: #{tpu_custom_call.1} parent=11 // pred_fallthru
          _
        // Predicated region
        $region25: #{tpu_custom_call.1} parent=11 // pred_check
          %p245 = pneg %p131
        $region26: #{tpu_custom_call.1} parent=11 // pred_check_branch
          %247 = sbr.rel (%p245) target = $region28
        $region27: #{tpu_custom_call.1} parent=11 // pred_region
          _
        $region28: #{tpu_custom_call.1} parent=11 // pred_fallthru
          _
        // Predicated region
        $region29: #{tpu_custom_call.1} parent=11 // pred_check
          %p248 = pneg %p152
        $region30: #{tpu_custom_call.1} parent=11 // pred_check_branch
          %250 = sbr.rel (%p248) target = $region32
        $region31: #{tpu_custom_call.1} parent=11 // pred_region
          %252 = vsyncadd [#allocation9], 0
          %s253 = sshll.u32 %s5, 4
          %s254 = int_to_ptr.hbm [resolvable:$true] %s253
          %s255 = sshll.u32 [#allocation8], 4
          %s256 = int_to_ptr.vmem [resolvable:$true] %s255
          %261 = dma.hbm_to_vmem [thread:$0]  %s254, 1024, %s256, [#allocation9], 64, 64, 4
        $region32: #{tpu_custom_call.1} parent=11 // pred_fallthru
          _
        // Predicated region
        $region33: #{tpu_custom_call.1} parent=11 // pred_check
          %p262 = pneg %p173
        $region34: #{tpu_custom_call.1} parent=11 // pred_check_branch
          %264 = sbr.rel (%p262) target = $region36
        $region35: #{tpu_custom_call.1} parent=11 // pred_region
          _
        $region36: #{tpu_custom_call.1} parent=11 // pred_fallthru
          _
      $region12: #{tpu_custom_call.1} parent=5 // pred_fallthru
        _
      %p265 = scmp.lt.s32.totalorder %s21, 2
      // Predicated region
      $region37: #{tpu_custom_call.1} parent=5 // pred_check
        %p266 = pneg %p265
      $region38: #{tpu_custom_call.1} parent=5 // pred_check_branch
        %268 = sbr.rel (%p266) target = $region40
      $region39: #{tpu_custom_call.1} parent=5 // pred_region
        // Predicated region
        $region41: #{tpu_custom_call.1} parent=39 // pred_check
          %p269 = pneg %p41
        $region42: #{tpu_custom_call.1} parent=39 // pred_check_branch
          %271 = sbr.rel (%p269) target = $region44
        $region43: #{tpu_custom_call.1} parent=39 // pred_region
          %s272 = sand.u32 %s31, 1
          %s273 = scalar_lea.sflag [#allocation3], %s272
          %s274 = sand.u32 %s31, 1
          %s275 = smul.addr %s274, 8
          %s276 = scalar_lea.vmem [#allocation2], %s275
          %278 = vsyncadd %s273, 0
          %s279 = smul.addr %s21, 8
          %s280 = scalar_lea.hbm %s0, %s279
          %s282 = sshll.u32 %s280, 4
          %s283 = int_to_ptr.hbm [resolvable:$true] %s282
          %s284 = sshll.u32 %s276, 4
          %s285 = int_to_ptr.vmem [resolvable:$true] %s284
          %287 = dma.hbm_to_vmem [thread:$0]  %s283, 128, %s285, %s273
        $region44: #{tpu_custom_call.1} parent=39 // pred_fallthru
          _
      $region40: #{tpu_custom_call.1} parent=5 // pred_fallthru
        _
      %p288 = scmp.le.s32.totalorder 1, %s21
      %p289 = scmp.lt.s32.totalorder %s21, 3
      %p290 = pnand %p288, %p289
      %p291 = pneg %p290
      // Predicated region
      $region45: #{tpu_custom_call.1} parent=5 // pred_check
        _
      $region46: #{tpu_custom_call.1} parent=5 // pred_check_branch
        %293 = sbr.rel (%p290) target = $region48
      $region47: #{tpu_custom_call.1} parent=5 // pred_region
        %s294 = ssub.s32 %s21, 1
        %s295 = sand.u32 %s34, 1
        %s296 = scalar_lea.sflag [#allocation3], %s295
        %s297 = sand.u32 %s34, 1
        %s298 = smul.addr %s297, 8
        %s299 = scalar_lea.vmem [#allocation2], %s298
        // Predicated region
        $region49: #{tpu_custom_call.1} parent=47 // pred_check
          %p300 = pneg %p47
        $region50: #{tpu_custom_call.1} parent=47 // pred_check_branch
          %302 = sbr.rel (%p300) target = $region52
        $region51: #{tpu_custom_call.1} parent=47 // pred_region
          %304 = dma.done %s296, 128
        $region52: #{tpu_custom_call.1} parent=47 // pred_fallthru
          _
        // Predicated region
        $region53: #{tpu_custom_call.1} parent=47 // pred_check
          %p305 = pneg %p68
        $region54: #{tpu_custom_call.1} parent=47 // pred_check_branch
          %307 = sbr.rel (%p305) target = $region56
        $region55: #{tpu_custom_call.1} parent=47 // pred_region
          %309 = dma.done [#allocation6], 128
        $region56: #{tpu_custom_call.1} parent=47 // pred_fallthru
          _
        // Predicated region
        $region57: #{tpu_custom_call.1} parent=47 // pred_check
          %p310 = pneg %p110
        $region58: #{tpu_custom_call.1} parent=47 // pred_check_branch
          %312 = sbr.rel (%p310) target = $region60
        $region59: #{tpu_custom_call.1} parent=47 // pred_region
          %314 = dma.done [#allocation6], 1024
        $region60: #{tpu_custom_call.1} parent=47 // pred_fallthru
          _
        // Predicated region
        $region61: #{tpu_custom_call.1} parent=47 // pred_check
          %p315 = pneg %p152
        $region62: #{tpu_custom_call.1} parent=47 // pred_check_branch
          %317 = sbr.rel (%p315) target = $region64
        $region63: #{tpu_custom_call.1} parent=47 // pred_region
          %319 = dma.done [#allocation9], 1024
        $region64: #{tpu_custom_call.1} parent=47 // pred_fallthru
          _
        %s320 = sand.u32 %s34, 1
        %s321 = scalar_lea.sflag [#allocation3], %s320
        %s322 = sand.u32 %s34, 1
        %s323 = smul.addr %s322, 8
        %s324 = scalar_lea.vmem [#allocation2], %s323
        %p325 = pneg %p47
        %p326 = pneg %p44
        %p327 = pneg %p68
        %p328 = pneg %p65
        %p329 = pneg %p89
        %p330 = pneg %p86
        %p331 = pneg %p110
        %p332 = pneg %p107
        %p333 = pneg %p131
        %p334 = pneg %p128
        %p335 = pneg %p152
        %p336 = pneg %p149
        %p337 = pneg %p173
        %p338 = pneg %p170
        %p339 = pneg %p199
        %p340 = pneg %p196
        %s341 = sand.u32 %s186, 1
        %s342 = scalar_lea.sflag [#allocation4], %s341
        %s343 = sand.u32 %s186, 1
        %s344 = smul.addr %s343, 8
        %s345 = scalar_lea.vmem [#allocation10], %s344
        %v347 = vld [vmem:[%s299] sm:$0xff]
        %v348 = vld [vmem:[#allocation5] sm:$0xf]
        %v349 = vld [vmem:[#allocation5 + $0x4] sm:$0xf]
        %v350 = vld [vmem:[%s2] sm:$0x1]
        %v351 = vpack.c.bf16 %v347, %v347
        %v353 = vperm.slane %v350, 0
        %v357 = vunpack.c.l.b16 %v348
        %v358 = vunpack.c.l.b16 %v349
        %v359 = vpack.c.b16 %v358, %v357
        %vm361 = vcmask 130048
        %v363 = vsel %vm361, %v351, 0
        %365 = vmatpush.bf16.msra.mxu0 0
        %366 = vmatpush.bf16.msra.mxu0 0
        %367 = vmatpush.bf16.msra.mxu0 0
        %368 = vmatpush.bf16.msra.mxu0 0
        %369 = vmatpush.bf16.msra.mxu0 0
        %370 = vmatpush.bf16.msra.mxu0 0
        %371 = vmatpush.bf16.msra.mxu0 0
        %372 = vmatpush.bf16.msra.mxu0 %v359
        %373 = vmatmul.bf16.gmra.mxu0 %v363
        %v374 = vpop.f32.mrf.mxu0
        %v375 = vadd.f32 %v353, %v374
        %v376 = vpop.f32.mrf.mxu0
        %377 = vdwg.mxu0
        %v378 = vmax.f32 %v375, 0.0
        %v379 = vld [vmem:[#allocation7] sm:$0xf]
        %v380 = vld [vmem:[#allocation7 + $0x4] sm:$0xf]
        %v381 = vld [vmem:[#allocation7 + $0x8] sm:$0xf]
        %v382 = vld [vmem:[#allocation7 + $0xc] sm:$0xf]
        %v383 = vld [vmem:[#allocation7 + $0x10] sm:$0xf]
        %v384 = vld [vmem:[#allocation7 + $0x14] sm:$0xf]
        %v385 = vld [vmem:[#allocation7 + $0x18] sm:$0xf]
        %v386 = vld [vmem:[#allocation7 + $0x1c] sm:$0xf]
        %v387 = vld [vmem:[#allocation7 + $0x20] sm:$0xf]
        %v388 = vld [vmem:[#allocation7 + $0x24] sm:$0xf]
        %v389 = vld [vmem:[#allocation7 + $0x28] sm:$0xf]
        %v390 = vld [vmem:[#allocation7 + $0x2c] sm:$0xf]
        %v391 = vld [vmem:[#allocation7 + $0x30] sm:$0xf]
        %v392 = vld [vmem:[#allocation7 + $0x34] sm:$0xf]
        %v393 = vld [vmem:[#allocation7 + $0x38] sm:$0xf]
        %v394 = vld [vmem:[#allocation7 + $0x3c] sm:$0xf]
        %v395 = vld [vmem:[%s4] sm:$0x1]
        %v396 = vpack.c.bf16 %v378, %v378
        %v398 = vperm.slane %v395, 0
        %v416 = vunpack.c.l.b16 %v379
        %v417 = vunpack.c.l.b16 %v380
        %v418 = vunpack.c.l.b16 %v381
        %v419 = vunpack.c.l.b16 %v382
        %v420 = vunpack.c.l.b16 %v383
        %v421 = vunpack.c.l.b16 %v384
        %v422 = vunpack.c.l.b16 %v385
        %v423 = vunpack.c.l.b16 %v386
        %v424 = vunpack.c.l.b16 %v387
        %v425 = vunpack.c.l.b16 %v388
        %v426 = vunpack.c.l.b16 %v389
        %v427 = vunpack.c.l.b16 %v390
        %v428 = vunpack.c.l.b16 %v391
        %v429 = vunpack.c.l.b16 %v392
        %v430 = vunpack.c.l.b16 %v393
        %v431 = vunpack.c.l.b16 %v394
        %v432 = vpack.c.b16 %v417, %v416
        %v433 = vpack.c.b16 %v419, %v418
        %v434 = vpack.c.b16 %v421, %v420
        %v435 = vpack.c.b16 %v423, %v422
        %v436 = vpack.c.b16 %v425, %v424
        %v437 = vpack.c.b16 %v427, %v426
        %v438 = vpack.c.b16 %v429, %v428
        %v439 = vpack.c.b16 %v431, %v430
        %448 = vmatpush.bf16.msra.mxu0 %v439
        %449 = vmatpush.bf16.msra.mxu0 %v438
        %450 = vmatpush.bf16.msra.mxu0 %v437
        %451 = vmatpush.bf16.msra.mxu0 %v436
        %452 = vmatpush.bf16.msra.mxu0 %v435
        %453 = vmatpush.bf16.msra.mxu0 %v434
        %454 = vmatpush.bf16.msra.mxu0 %v433
        %455 = vmatpush.bf16.msra.mxu0 %v432
        %456 = vmatmul.bf16.gmra.mxu0 %v396
        %v457 = vpop.f32.mrf.mxu0
        %v458 = vadd.f32 %v398, %v457
        %v459 = vpop.f32.mrf.mxu0
        %460 = vdwg.mxu0
        %v461 = vmax.f32 %v458, 0.0
        %v462 = vld [vmem:[#allocation8] sm:$0xf]
        %v463 = vld [vmem:[#allocation8 + $0x4] sm:$0xf]
        %v464 = vld [vmem:[#allocation8 + $0x8] sm:$0xf]
        %v465 = vld [vmem:[#allocation8 + $0xc] sm:$0xf]
        %v466 = vld [vmem:[#allocation8 + $0x10] sm:$0xf]
        %v467 = vld [vmem:[#allocation8 + $0x14] sm:$0xf]
        %v468 = vld [vmem:[#allocation8 + $0x18] sm:$0xf]
        %v469 = vld [vmem:[#allocation8 + $0x1c] sm:$0xf]
        %v470 = vld [vmem:[#allocation8 + $0x20] sm:$0xf]
        %v471 = vld [vmem:[#allocation8 + $0x24] sm:$0xf]
        %v472 = vld [vmem:[#allocation8 + $0x28] sm:$0xf]
        %v473 = vld [vmem:[#allocation8 + $0x2c] sm:$0xf]
        %v474 = vld [vmem:[#allocation8 + $0x30] sm:$0xf]
        %v475 = vld [vmem:[#allocation8 + $0x34] sm:$0xf]
        %v476 = vld [vmem:[#allocation8 + $0x38] sm:$0xf]
        %v477 = vld [vmem:[#allocation8 + $0x3c] sm:$0xf]
        %v478 = vld [vmem:[%s6] sm:$0x1]
        %v479 = vpack.c.bf16 %v461, %v461
        %v481 = vperm.slane %v478, 0
        %v499 = vunpack.c.l.b16 %v462
        %v500 = vunpack.c.l.b16 %v463
        %v501 = vunpack.c.l.b16 %v464
        %v502 = vunpack.c.l.b16 %v465
        %v503 = vunpack.c.l.b16 %v466
        %v504 = vunpack.c.l.b16 %v467
        %v505 = vunpack.c.l.b16 %v468
        %v506 = vunpack.c.l.b16 %v469
        %v507 = vunpack.c.l.b16 %v470
        %v508 = vunpack.c.l.b16 %v471
        %v509 = vunpack.c.l.b16 %v472
        %v510 = vunpack.c.l.b16 %v473
        %v511 = vunpack.c.l.b16 %v474
        %v512 = vunpack.c.l.b16 %v475
        %v513 = vunpack.c.l.b16 %v476
        %v514 = vunpack.c.l.b16 %v477
        %v515 = vpack.c.b16 %v500, %v499
        %v516 = vpack.c.b16 %v502, %v501
        %v517 = vpack.c.b16 %v504, %v503
        %v518 = vpack.c.b16 %v506, %v505
        %v519 = vpack.c.b16 %v508, %v507
        %v520 = vpack.c.b16 %v510, %v509
        %v521 = vpack.c.b16 %v512, %v511
        %v522 = vpack.c.b16 %v514, %v513
        %531 = vmatpush.bf16.msra.mxu0 %v522
        %532 = vmatpush.bf16.msra.mxu0 %v521
        %533 = vmatpush.bf16.msra.mxu0 %v520
        %534 = vmatpush.bf16.msra.mxu0 %v519
        %535 = vmatpush.bf16.msra.mxu0 %v518
        %536 = vmatpush.bf16.msra.mxu0 %v517
        %537 = vmatpush.bf16.msra.mxu0 %v516
        %538 = vmatpush.bf16.msra.mxu0 %v515
        %539 = vmatmul.bf16.gmra.mxu0 %v479
        %v540 = vpop.f32.mrf.mxu0
        %v541 = vadd.f32 %v481, %v540
        %v542 = vpop.f32.mrf.mxu0
        %543 = vdwg.mxu0
        %544 = vst [vmem:[%s345] sm:$0xff] %v541
        %s545 = sand.u32 %s186, 1
        %s546 = scalar_lea.sflag [#allocation4], %s545
        %s547 = sand.u32 %s186, 1
        %s548 = smul.addr %s547, 8
        %s549 = scalar_lea.vmem [#allocation10], %s548
        // Predicated region
        $region65: #{tpu_custom_call.1} parent=47 // pred_check
          %p550 = pneg %p196
        $region66: #{tpu_custom_call.1} parent=47 // pred_check_branch
          %552 = sbr.rel (%p550) target = $region68
        $region67: #{tpu_custom_call.1} parent=47 // pred_region
          %554 = vsyncadd %s546, 0
          %s555 = smul.addr %s26, 8
          %s556 = scalar_lea.hbm %s7, %s555
          %s558 = sshll.u32 %s549, 4
          %s559 = int_to_ptr.vmem [resolvable:$true] %s558
          %s560 = sshll.u32 %s556, 4
          %s561 = int_to_ptr.hbm [resolvable:$true] %s560
          %563 = dma.vmem_to_hbm [thread:$0]  %s559, 128, %s561, %s546
        $region68: #{tpu_custom_call.1} parent=47 // pred_fallthru
          _
      $region48: #{tpu_custom_call.1} parent=5 // pred_fallthru
        _
      %p564 = scmp.le.s32.totalorder 2, %s21
      // Predicated region
      $region69: #{tpu_custom_call.1} parent=5 // pred_check
        %p565 = pneg %p564
      $region70: #{tpu_custom_call.1} parent=5 // pred_check_branch
        %567 = sbr.rel (%p565) target = $region72
      $region71: #{tpu_custom_call.1} parent=5 // pred_region
        %s568 = ssub.s32 %s21, 2
        // Predicated region
        $region73: #{tpu_custom_call.1} parent=71 // pred_check
          %p569 = pneg %p202
        $region74: #{tpu_custom_call.1} parent=71 // pred_check_branch
          %571 = sbr.rel (%p569) target = $region76
        $region75: #{tpu_custom_call.1} parent=71 // pred_region
          %s572 = sand.u32 %s187, 1
          %s573 = scalar_lea.sflag [#allocation4], %s572
          %s574 = sand.u32 %s187, 1
          %s575 = smul.addr %s574, 8
          %s576 = scalar_lea.vmem [#allocation10], %s575
          %578 = dma.done %s573, 128
        $region76: #{tpu_custom_call.1} parent=71 // pred_fallthru
          _
      $region72: #{tpu_custom_call.1} parent=5 // pred_fallthru
        _
    $region6: #{tpu_custom_call.1} parent=1 // loop_footer
      %s25 = sadd.s32 1, %s21
    $region7: #{tpu_custom_call.1} parent=1 // loop_footer_branch
      %20 = sbr.rel target = $region3
    $region8: #{tpu_custom_call.1} parent=1 // loop_exit
      _
    %579 = vsyncpa [#allocation3], 1
    %s580 = scalar_lea.sflag [#allocation3], 1
    %581 = vsyncpa %s580, 1
    %582 = vsyncpa [#allocation6], 1
    %583 = vsyncpa [#allocation9], 1
    %584 = vsyncpa [#allocation4], 1
    %s585 = scalar_lea.sflag [#allocation4], 1
    %586 = vsyncpa %s585, 1

// kernel: tpu_custom_call.1
$region0: #{tpu_custom_call.1}
  #allocation0 [shape = 'u32[]', space=smem, size = 0x4, offset = 0x4, fixed_abs, tag = 'smem constant byte address 0x4 - core index']
  #allocation1 [shape = 'u32[72,128]{1,0:T(1,128)}', space=vmem, size = 0x9000, scoped, tag = 'internal scratch']
  %s0 = inlined_call_operand.hbm [shape: f32[15,16], index: 0, kind: input, shape index: {}]
  %s1 = inlined_call_operand.hbm [shape: bf16[16,128], index: 1, kind: input, shape index: {}]
  %s2 = inlined_call_operand.vmem [shape: f32[1,128], index: 2, kind: input, shape index: {}]
  %s3 = inlined_call_operand.hbm [shape: bf16[128,128], index: 3, kind: input, shape index: {}]
  %s4 = inlined_call_operand.vmem [shape: f32[1,128], index: 4, kind: input, shape index: {}]
  %s5 = inlined_call_operand.hbm [shape: bf16[128,128], index: 5, kind: input, shape index: {}]
  %s6 = inlined_call_operand.vmem [shape: f32[1,128], index: 6, kind: input, shape index: {}]
  %s7 = inlined_call_operand.hbm [shape: f32[15,128], index: 7, kind: output, shape index: {}]
  %s8 = sld [smem:[#allocation0]]
  $region77: #{tpu_custom_call.1} parent=0
    _
  %s10 = ssub.s32 1, %s8
  %s11 = scalar_select 0, %s10, %s8
  $region1: #{tpu_custom_call.1} parent=0
    #allocation2 [shape = 'u8[8192]{0}', space=vmem, size = 0x2000, scoped, tag = 'input window, operand 0']
    #allocation3 [shape = 's32[2]{0}', space=sflag, size = 0x8, scoped, tag = 'scoped memory for tpu_custom_call.1']
    #allocation4 [shape = 's32[2]{0}', space=sflag, size = 0x8, scoped, tag = 'scoped memory for tpu_custom_call.1']
    #allocation5 [shape = 'u8[4096]{0}', space=vmem, size = 0x1000, scoped, tag = 'input window, operand 1, single buffered']
    #allocation6 [shape = 's32[1]{0}', space=sflag, size = 0x4, scoped, tag = 'scoped memory for tpu_custom_call.1']
    #allocation7 [shape = 'u8[32768]{0}', space=vmem, size = 0x8000, scoped, tag = 'input window, operand 3, single buffered']
    #allocation8 [shape = 'u8[32768]{0}', space=vmem, size = 0x8000, scoped, tag = 'input window, operand 5, single buffered']
    #allocation9 [shape = 's32[1]{0}', space=sflag, size = 0x4, scoped, tag = 'scoped memory for tpu_custom_call.1']
    #allocation10 [shape = 'u8[8192]{0}', space=vmem, size = 0x2000, scoped, tag = 'output window, operand 0']
    %12 = vsyncpa [#allocation3], 0
    %s13 = scalar_lea.sflag [#allocation3], 1
    %14 = vsyncpa %s13, 0
    %15 = vsyncpa [#allocation6], 0
    %16 = vsyncpa [#allocation9], 0
    %17 = vsyncpa [#allocation4], 0
    %s18 = scalar_lea.sflag [#allocation4], 1
    %19 = vsyncpa %s18, 0
    loop: start=0, step=1, limit=4
    $region2: #{tpu_custom_call.1} parent=1 // loop_pre_header
      _
    $region3: #{tpu_custom_call.1} parent=1 // loop_header
      %s21 = sphi 0, %s25
      %p22 = scmp.ge.s32.totalorder %s21, 4
      %s31 = sphi 0, %s33
      %s34 = sphi 0, %s31
      %s35 = sphi 0, %s34
      %s51 = sphi 0, %s35
      %s55 = sphi 0, %s55
      %s57 = sphi 0, %s55
      %s58 = sphi 0, %s57
      %s72 = sphi 0, %s58
      %s76 = sphi 0, %s76
      %s78 = sphi 0, %s76
      %s79 = sphi 0, %s78
      %s93 = sphi 0, %s79
      %s97 = sphi 0, %s97
      %s99 = sphi 0, %s97
      %s100 = sphi 0, %s99
      %s114 = sphi 0, %s100
      %s118 = sphi 0, %s118
      %s120 = sphi 0, %s118
      %s121 = sphi 0, %s120
      %s135 = sphi 0, %s121
      %s139 = sphi 0, %s139
      %s141 = sphi 0, %s139
      %s142 = sphi 0, %s141
      %s156 = sphi 0, %s142
      %s160 = sphi 0, %s160
      %s162 = sphi 0, %s160
      %s163 = sphi 0, %s162
      %s177 = sphi 0, %s163
      %s183 = sphi 0, %s185
      %s186 = sphi 0, %s183
      %s187 = sphi 0, %s186
      %s203 = sphi 0, %s187
    $region4: #{tpu_custom_call.1} parent=1 // loop_header_branch
      %24 = sbr.rel (%p22) target = $region8
    $region5: #{tpu_custom_call.1} parent=1 // loop_body
      %s26 = ssub.s32 %s21, 1
      %s27 = ssub.s32 %s21, 2
      %s28 = sadd.s32 %s21, 1
      %s29 = ssub.s32 %s21, %s28
      %p30 = scmp.eq.s32.totalorder %s29, 0
      %s32 = sadd.s32 %s31, 1
      %s33 = scalar_select %p30, %s31, %s32
      %p36 = pneg %p30
      %p37 = scmp.eq.s32.totalorder %s21, 1
      %p38 = por %p36, %p37
      %p39 = scmp.ne.s32.totalorder %s31, %s34
      %p40 = scmp.eq.s32.totalorder %s21, 0
      %p41 = por %p39, %p40
      %p42 = scmp.ne.s32.totalorder %s31, %s34
      %p43 = scmp.eq.s32.totalorder %s26, 1
      %p44 = por %p42, %p43
      %p45 = scmp.ne.s32.totalorder %s34, %s35
      %p46 = scmp.eq.s32.totalorder %s26, 0
      %p47 = por %p45, %p46
      %p48 = scmp.ne.s32.totalorder %s34, %s35
      %p49 = scmp.eq.s32.totalorder %s27, 1
      %p50 = por %p48, %p49
      %p52 = scmp.ne.s32.totalorder %s35, %s51
      %p53 = scmp.eq.s32.totalorder %s27, 0
      %p54 = por %p52, %p53
      %s56 = sadd.s32 %s55, 1
      %p59 = scmp.eq.s32.totalorder %s21, 1
      %p60 = scmp.ne.s32.totalorder %s55, %s57
      %p61 = scmp.eq.s32.totalorder %s21, 0
      %p62 = por %p60, %p61
      %p63 = scmp.ne.s32.totalorder %s55, %s57
      %p64 = scmp.eq.s32.totalorder %s26, 1
      %p65 = por %p63, %p64
      %p66 = scmp.ne.s32.totalorder %s57, %s58
      %p67 = scmp.eq.s32.totalorder %s26, 0
      %p68 = por %p66, %p67
      %p69 = scmp.ne.s32.totalorder %s57, %s58
      %p70 = scmp.eq.s32.totalorder %s27, 1
      %p71 = por %p69, %p70
      %p73 = scmp.ne.s32.totalorder %s58, %s72
      %p74 = scmp.eq.s32.totalorder %s27, 0
      %p75 = por %p73, %p74
      %s77 = sadd.s32 %s76, 1
      %p80 = scmp.eq.s32.totalorder %s21, 1
      %p81 = scmp.ne.s32.totalorder %s76, %s78
      %p82 = scmp.eq.s32.totalorder %s21, 0
      %p83 = por %p81, %p82
      %p84 = scmp.ne.s32.totalorder %s76, %s78
      %p85 = scmp.eq.s32.totalorder %s26, 1
      %p86 = por %p84, %p85
      %p87 = scmp.ne.s32.totalorder %s78, %s79
      %p88 = scmp.eq.s32.totalorder %s26, 0
      %p89 = por %p87, %p88
      %p90 = scmp.ne.s32.totalorder %s78, %s79
      %p91 = scmp.eq.s32.totalorder %s27, 1
      %p92 = por %p90, %p91
      %p94 = scmp.ne.s32.totalorder %s79, %s93
      %p95 = scmp.eq.s32.totalorder %s27, 0
      %p96 = por %p94, %p95
      %s98 = sadd.s32 %s97, 1
      %p101 = scmp.eq.s32.totalorder %s21, 1
      %p102 = scmp.ne.s32.totalorder %s97, %s99
      %p103 = scmp.eq.s32.totalorder %s21, 0
      %p104 = por %p102, %p103
      %p105 = scmp.ne.s32.totalorder %s97, %s99
      %p106 = scmp.eq.s32.totalorder %s26, 1
      %p107 = por %p105, %p106
      %p108 = scmp.ne.s32.totalorder %s99, %s100
      %p109 = scmp.eq.s32.totalorder %s26, 0
      %p110 = por %p108, %p109
      %p111 = scmp.ne.s32.totalorder %s99, %s100
      %p112 = scmp.eq.s32.totalorder %s27, 1
      %p113 = por %p111, %p112
      %p115 = scmp.ne.s32.totalorder %s100, %s114
      %p116 = scmp.eq.s32.totalorder %s27, 0
      %p117 = por %p115, %p116
      %s119 = sadd.s32 %s118, 1
      %p122 = scmp.eq.s32.totalorder %s21, 1
      %p123 = scmp.ne.s32.totalorder %s118, %s120
      %p124 = scmp.eq.s32.totalorder %s21, 0
      %p125 = por %p123, %p124
      %p126 = scmp.ne.s32.totalorder %s118, %s120
      %p127 = scmp.eq.s32.totalorder %s26, 1
      %p128 = por %p126, %p127
      %p129 = scmp.ne.s32.totalorder %s120, %s121
      %p130 = scmp.eq.s32.totalorder %s26, 0
      %p131 = por %p129, %p130
      %p132 = scmp.ne.s32.totalorder %s120, %s121
      %p133 = scmp.eq.s32.totalorder %s27, 1
      %p134 = por %p132, %p133
      %p136 = scmp.ne.s32.totalorder %s121, %s135
      %p137 = scmp.eq.s32.totalorder %s27, 0
      %p138 = por %p136, %p137
      %s140 = sadd.s32 %s139, 1
      %p143 = scmp.eq.s32.totalorder %s21, 1
      %p144 = scmp.ne.s32.totalorder %s139, %s141
      %p145 = scmp.eq.s32.totalorder %s21, 0
      %p146 = por %p144, %p145
      %p147 = scmp.ne.s32.totalorder %s139, %s141
      %p148 = scmp.eq.s32.totalorder %s26, 1
      %p149 = por %p147, %p148
      %p150 = scmp.ne.s32.totalorder %s141, %s142
      %p151 = scmp.eq.s32.totalorder %s26, 0
      %p152 = por %p150, %p151
      %p153 = scmp.ne.s32.totalorder %s141, %s142
      %p154 = scmp.eq.s32.totalorder %s27, 1
      %p155 = por %p153, %p154
      %p157 = scmp.ne.s32.totalorder %s142, %s156
      %p158 = scmp.eq.s32.totalorder %s27, 0
      %p159 = por %p157, %p158
      %s161 = sadd.s32 %s160, 1
      %p164 = scmp.eq.s32.totalorder %s21, 1
      %p165 = scmp.ne.s32.totalorder %s160, %s162
      %p166 = scmp.eq.s32.totalorder %s21, 0
      %p167 = por %p165, %p166
      %p168 = scmp.ne.s32.totalorder %s160, %s162
      %p169 = scmp.eq.s32.totalorder %s26, 1
      %p170 = por %p168, %p169
      %p171 = scmp.ne.s32.totalorder %s162, %s163
      %p172 = scmp.eq.s32.totalorder %s26, 0
      %p173 = por %p171, %p172
      %p174 = scmp.ne.s32.totalorder %s162, %s163
      %p175 = scmp.eq.s32.totalorder %s27, 1
      %p176 = por %p174, %p175
      %p178 = scmp.ne.s32.totalorder %s163, %s177
      %p179 = scmp.eq.s32.totalorder %s27, 0
      %p180 = por %p178, %p179
      %s181 = ssub.s32 %s21, %s28
      %p182 = scmp.eq.s32.totalorder %s181, 0
      %s184 = sadd.s32 %s183, 1
      %s185 = scalar_select %p182, %s183, %s184
      %p188 = pneg %p182
      %p189 = scmp.eq.s32.totalorder %s21, 1
      %p190 = por %p188, %p189
      %p191 = scmp.ne.s32.totalorder %s183, %s186
      %p192 = scmp.eq.s32.totalorder %s21, 0
      %p193 = por %p191, %p192
      %p194 = scmp.ne.s32.totalorder %s183, %s186
      %p195 = scmp.eq.s32.totalorder %s26, 1
      %p196 = por %p194, %p195
      %p197 = scmp.ne.s32.totalorder %s186, %s187
      %p198 = scmp.eq.s32.totalorder %s26, 0
      %p199 = por %p197, %p198
      %p200 = scmp.ne.s32.totalorder %s186, %s187
      %p201 = scmp.eq.s32.totalorder %s27, 1
      %p202 = por %p200, %p201
      %p204 = scmp.ne.s32.totalorder %s187, %s203
      %p205 = scmp.eq.s32.totalorder %s27, 0
      %p206 = por %p204, %p205
      %p207 = scmp.le.s32.totalorder 1, %s21
      %p208 = scmp.lt.s32.totalorder %s21, 3
      %p209 = pnand %p207, %p208
      %p210 = pneg %p209
      // Predicated region
      $region9: #{tpu_custom_call.1} parent=5 // pred_check
        _
      $region10: #{tpu_custom_call.1} parent=5 // pred_check_branch
        %212 = sbr.rel (%p209) target = $region12
      $region11: #{tpu_custom_call.1} parent=5 // pred_region
        %s213 = ssub.s32 %s21, 1
        // Predicated region
        $region13: #{tpu_custom_call.1} parent=11 // pred_check
          %p214 = pneg %p68
        $region14: #{tpu_custom_call.1} parent=11 // pred_check_branch
          %216 = sbr.rel (%p214) target = $region16
        $region15: #{tpu_custom_call.1} parent=11 // pred_region
          %218 = vsyncadd [#allocation6], 0
          %s219 = sshll.u32 %s1, 4
          %s220 = int_to_ptr.hbm [resolvable:$true] %s219
          %s221 = sshll.u32 [#allocation5], 4
          %s222 = int_to_ptr.vmem [resolvable:$true] %s221
          %227 = dma.hbm_to_vmem [thread:$0]  %s220, 128, %s222, [#allocation6], 64, 64, 4
        $region16: #{tpu_custom_call.1} parent=11 // pred_fallthru
          _
        // Predicated region
        $region17: #{tpu_custom_call.1} parent=11 // pred_check
          %p228 = pneg %p89
        $region18: #{tpu_custom_call.1} parent=11 // pred_check_branch
          %230 = sbr.rel (%p228) target = $region20
        $region19: #{tpu_custom_call.1} parent=11 // pred_region
          _
        $region20: #{tpu_custom_call.1} parent=11 // pred_fallthru
          _
        // Predicated region
        $region21: #{tpu_custom_call.1} parent=11 // pred_check
          %p231 = pneg %p110
        $region22: #{tpu_custom_call.1} parent=11 // pred_check_branch
          %233 = sbr.rel (%p231) target = $region24
        $region23: #{tpu_custom_call.1} parent=11 // pred_region
          %235 = vsyncadd [#allocation6], 0
          %s236 = sshll.u32 %s3, 4
          %s237 = int_to_ptr.hbm [resolvable:$true] %s236
          %s238 = sshll.u32 [#allocation7], 4
          %s239 = int_to_ptr.vmem [resolvable:$true] %s238
          %244 = dma.hbm_to_vmem [thread:$0]  %s237, 1024, %s239, [#allocation6], 64, 64, 4
        $region24: #{tpu_custom_call.1} parent=11 // pred_fallthru
          _
        // Predicated region
        $region25: #{tpu_custom_call.1} parent=11 // pred_check
          %p245 = pneg %p131
        $region26: #{tpu_custom_call.1} parent=11 // pred_check_branch
          %247 = sbr.rel (%p245) target = $region28
        $region27: #{tpu_custom_call.1} parent=11 // pred_region
          _
        $region28: #{tpu_custom_call.1} parent=11 // pred_fallthru
          _
        // Predicated region
        $region29: #{tpu_custom_call.1} parent=11 // pred_check
          %p248 = pneg %p152
        $region30: #{tpu_custom_call.1} parent=11 // pred_check_branch
          %250 = sbr.rel (%p248) target = $region32
        $region31: #{tpu_custom_call.1} parent=11 // pred_region
          %252 = vsyncadd [#allocation9], 0
          %s253 = sshll.u32 %s5, 4
          %s254 = int_to_ptr.hbm [resolvable:$true] %s253
          %s255 = sshll.u32 [#allocation8], 4
          %s256 = int_to_ptr.vmem [resolvable:$true] %s255
          %261 = dma.hbm_to_vmem [thread:$0]  %s254, 1024, %s256, [#allocation9], 64, 64, 4
        $region32: #{tpu_custom_call.1} parent=11 // pred_fallthru
          _
        // Predicated region
        $region33: #{tpu_custom_call.1} parent=11 // pred_check
          %p262 = pneg %p173
        $region34: #{tpu_custom_call.1} parent=11 // pred_check_branch
          %264 = sbr.rel (%p262) target = $region36
        $region35: #{tpu_custom_call.1} parent=11 // pred_region
          _
        $region36: #{tpu_custom_call.1} parent=11 // pred_fallthru
          _
      $region12: #{tpu_custom_call.1} parent=5 // pred_fallthru
        _
      %p265 = scmp.lt.s32.totalorder %s21, 2
      // Predicated region
      $region37: #{tpu_custom_call.1} parent=5 // pred_check
        %p266 = pneg %p265
      $region38: #{tpu_custom_call.1} parent=5 // pred_check_branch
        %268 = sbr.rel (%p266) target = $region40
      $region39: #{tpu_custom_call.1} parent=5 // pred_region
        // Predicated region
        $region41: #{tpu_custom_call.1} parent=39 // pred_check
          %p269 = pneg %p41
        $region42: #{tpu_custom_call.1} parent=39 // pred_check_branch
          %271 = sbr.rel (%p269) target = $region44
        $region43: #{tpu_custom_call.1} parent=39 // pred_region
          %s272 = sand.u32 %s31, 1
          %s273 = scalar_lea.sflag [#allocation3], %s272
          %s274 = sand.u32 %s31, 1
          %s275 = smul.addr %s274, 8
          %s276 = scalar_lea.vmem [#allocation2], %s275
          %278 = vsyncadd %s273, 0
          %s279 = smul.addr %s21, 8
          %s280 = scalar_lea.hbm %s0, %s279
          %s282 = sshll.u32 %s280, 4
          %s283 = int_to_ptr.hbm [resolvable:$true] %s282
          %s284 = sshll.u32 %s276, 4
          %s285 = int_to_ptr.vmem [resolvable:$true] %s284
          %287 = dma.hbm_to_vmem [thread:$0]  %s283, 128, %s285, %s273
        $region44: #{tpu_custom_call.1} parent=39 // pred_fallthru
          _
      $region40: #{tpu_custom_call.1} parent=5 // pred_fallthru
        _
      %p288 = scmp.le.s32.totalorder 1, %s21
      %p289 = scmp.lt.s32.totalorder %s21, 3
      %p290 = pnand %p288, %p289
      %p291 = pneg %p290
      // Predicated region
      $region45: #{tpu_custom_call.1} parent=5 // pred_check
        _
      $region46: #{tpu_custom_call.1} parent=5 // pred_check_branch
        %293 = sbr.rel (%p290) target = $region48
      $region47: #{tpu_custom_call.1} parent=5 // pred_region
        %s294 = ssub.s32 %s21, 1
        %s295 = sand.u32 %s34, 1
        %s296 = scalar_lea.sflag [#allocation3], %s295
        %s297 = sand.u32 %s34, 1
        %s298 = smul.addr %s297, 8
        %s299 = scalar_lea.vmem [#allocation2], %s298
        // Predicated region
        $region49: #{tpu_custom_call.1} parent=47 // pred_check
          %p300 = pneg %p47
        $region50: #{tpu_custom_call.1} parent=47 // pred_check_branch
          %302 = sbr.rel (%p300) target = $region52
        $region51: #{tpu_custom_call.1} parent=47 // pred_region
          %304 = dma.done %s296, 128
        $region52: #{tpu_custom_call.1} parent=47 // pred_fallthru
          _
        // Predicated region
        $region53: #{tpu_custom_call.1} parent=47 // pred_check
          %p305 = pneg %p68
        $region54: #{tpu_custom_call.1} parent=47 // pred_check_branch
          %307 = sbr.rel (%p305) target = $region56
        $region55: #{tpu_custom_call.1} parent=47 // pred_region
          %309 = dma.done [#allocation6], 128
        $region56: #{tpu_custom_call.1} parent=47 // pred_fallthru
          _
        // Predicated region
        $region57: #{tpu_custom_call.1} parent=47 // pred_check
          %p310 = pneg %p110
        $region58: #{tpu_custom_call.1} parent=47 // pred_check_branch
          %312 = sbr.rel (%p310) target = $region60
        $region59: #{tpu_custom_call.1} parent=47 // pred_region
          %314 = dma.done [#allocation6], 1024
        $region60: #{tpu_custom_call.1} parent=47 // pred_fallthru
          _
        // Predicated region
        $region61: #{tpu_custom_call.1} parent=47 // pred_check
          %p315 = pneg %p152
        $region62: #{tpu_custom_call.1} parent=47 // pred_check_branch
          %317 = sbr.rel (%p315) target = $region64
        $region63: #{tpu_custom_call.1} parent=47 // pred_region
          %319 = dma.done [#allocation9], 1024
        $region64: #{tpu_custom_call.1} parent=47 // pred_fallthru
          _
        %s320 = sand.u32 %s34, 1
        %s321 = scalar_lea.sflag [#allocation3], %s320
        %s322 = sand.u32 %s34, 1
        %s323 = smul.addr %s322, 8
        %s324 = scalar_lea.vmem [#allocation2], %s323
        %p325 = pneg %p47
        %p326 = pneg %p44
        %p327 = pneg %p68
        %p328 = pneg %p65
        %p329 = pneg %p89
        %p330 = pneg %p86
        %p331 = pneg %p110
        %p332 = pneg %p107
        %p333 = pneg %p131
        %p334 = pneg %p128
        %p335 = pneg %p152
        %p336 = pneg %p149
        %p337 = pneg %p173
        %p338 = pneg %p170
        %p339 = pneg %p199
        %p340 = pneg %p196
        %s341 = sand.u32 %s186, 1
        %s342 = scalar_lea.sflag [#allocation4], %s341
        %s343 = sand.u32 %s186, 1
        %s344 = smul.addr %s343, 8
        %s345 = scalar_lea.vmem [#allocation10], %s344
        %v347 = vld [vmem:[%s299] sm:$0xff]
        %v348 = vld [vmem:[#allocation5] sm:$0xf]
        %v349 = vld [vmem:[#allocation5 + $0x4] sm:$0xf]
        %v350 = vld [vmem:[%s2] sm:$0x1]
        %v351 = vpack.c.bf16 %v347, %v347
        %v353 = vperm.slane %v350, 0
        %v357 = vunpack.c.l.b16 %v348
        %v358 = vunpack.c.l.b16 %v349
        %v359 = vpack.c.b16 %v358, %v357
        %vm361 = vcmask 130048
        %v363 = vsel %vm361, %v351, 0
        %365 = vmatpush.bf16.msra.mxu0 0
        %366 = vmatpush.bf16.msra.mxu0 0
        %367 = vmatpush.bf16.msra.mxu0 0
        %368 = vmatpush.bf16.msra.mxu0 0
        %369 = vmatpush.bf16.msra.mxu0 0
        %370 = vmatpush.bf16.msra.mxu0 0
        %371 = vmatpush.bf16.msra.mxu0 0
        %372 = vmatpush.bf16.msra.mxu0 %v359
        %373 = vmatmul.bf16.gmra.mxu0 %v363
        %v374 = vpop.f32.mrf.mxu0
        %v375 = vadd.f32 %v353, %v374
        %v376 = vpop.f32.mrf.mxu0
        %377 = vdwg.mxu0
        %v378 = vmax.f32 %v375, 0.0
        %v379 = vld [vmem:[#allocation7] sm:$0xf]
        %v380 = vld [vmem:[#allocation7 + $0x4] sm:$0xf]
        %v381 = vld [vmem:[#allocation7 + $0x8] sm:$0xf]
        %v382 = vld [vmem:[#allocation7 + $0xc] sm:$0xf]
        %v383 = vld [vmem:[#allocation7 + $0x10] sm:$0xf]
        %v384 = vld [vmem:[#allocation7 + $0x14] sm:$0xf]
        %v385 = vld [vmem:[#allocation7 + $0x18] sm:$0xf]
        %v386 = vld [vmem:[#allocation7 + $0x1c] sm:$0xf]
        %v387 = vld [vmem:[#allocation7 + $0x20] sm:$0xf]
        %v388 = vld [vmem:[#allocation7 + $0x24] sm:$0xf]
        %v389 = vld [vmem:[#allocation7 + $0x28] sm:$0xf]
        %v390 = vld [vmem:[#allocation7 + $0x2c] sm:$0xf]
        %v391 = vld [vmem:[#allocation7 + $0x30] sm:$0xf]
        %v392 = vld [vmem:[#allocation7 + $0x34] sm:$0xf]
        %v393 = vld [vmem:[#allocation7 + $0x38] sm:$0xf]
        %v394 = vld [vmem:[#allocation7 + $0x3c] sm:$0xf]
        %v395 = vld [vmem:[%s4] sm:$0x1]
        %v396 = vpack.c.bf16 %v378, %v378
        %v398 = vperm.slane %v395, 0
        %v416 = vunpack.c.l.b16 %v379
        %v417 = vunpack.c.l.b16 %v380
        %v418 = vunpack.c.l.b16 %v381
        %v419 = vunpack.c.l.b16 %v382
        %v420 = vunpack.c.l.b16 %v383
        %v421 = vunpack.c.l.b16 %v384
        %v422 = vunpack.c.l.b16 %v385
        %v423 = vunpack.c.l.b16 %v386
        %v424 = vunpack.c.l.b16 %v387
        %v425 = vunpack.c.l.b16 %v388
        %v426 = vunpack.c.l.b16 %v389
        %v427 = vunpack.c.l.b16 %v390
        %v428 = vunpack.c.l.b16 %v391
        %v429 = vunpack.c.l.b16 %v392
        %v430 = vunpack.c.l.b16 %v393
        %v431 = vunpack.c.l.b16 %v394
        %v432 = vpack.c.b16 %v417, %v416
        %v433 = vpack.c.b16 %v419, %v418
        %v434 = vpack.c.b16 %v421, %v420
        %v435 = vpack.c.b16 %v423, %v422
        %v436 = vpack.c.b16 %v425, %v424
        %v437 = vpack.c.b16 %v427, %v426
        %v438 = vpack.c.b16 %v429, %v428
        %v439 = vpack.c.b16 %v431, %v430
        %448 = vmatpush.bf16.msra.mxu0 %v439
        %449 = vmatpush.bf16.msra.mxu0 %v438
        %450 = vmatpush.bf16.msra.mxu0 %v437
        %451 = vmatpush.bf16.msra.mxu0 %v436
        %452 = vmatpush.bf16.msra.mxu0 %v435
        %453 = vmatpush.bf16.msra.mxu0 %v434
        %454 = vmatpush.bf16.msra.mxu0 %v433
        %455 = vmatpush.bf16.msra.mxu0 %v432
        %456 = vmatmul.bf16.gmra.mxu0 %v396
        %v457 = vpop.f32.mrf.mxu0
        %v458 = vadd.f32 %v398, %v457
        %v459 = vpop.f32.mrf.mxu0
        %460 = vdwg.mxu0
        %v461 = vmax.f32 %v458, 0.0
        %v462 = vld [vmem:[#allocation8] sm:$0xf]
        %v463 = vld [vmem:[#allocation8 + $0x4] sm:$0xf]
        %v464 = vld [vmem:[#allocation8 + $0x8] sm:$0xf]
        %v465 = vld [vmem:[#allocation8 + $0xc] sm:$0xf]
        %v466 = vld [vmem:[#allocation8 + $0x10] sm:$0xf]
        %v467 = vld [vmem:[#allocation8 + $0x14] sm:$0xf]
        %v468 = vld [vmem:[#allocation8 + $0x18] sm:$0xf]
        %v469 = vld [vmem:[#allocation8 + $0x1c] sm:$0xf]
        %v470 = vld [vmem:[#allocation8 + $0x20] sm:$0xf]
        %v471 = vld [vmem:[#allocation8 + $0x24] sm:$0xf]
        %v472 = vld [vmem:[#allocation8 + $0x28] sm:$0xf]
        %v473 = vld [vmem:[#allocation8 + $0x2c] sm:$0xf]
        %v474 = vld [vmem:[#allocation8 + $0x30] sm:$0xf]
        %v475 = vld [vmem:[#allocation8 + $0x34] sm:$0xf]
        %v476 = vld [vmem:[#allocation8 + $0x38] sm:$0xf]
        %v477 = vld [vmem:[#allocation8 + $0x3c] sm:$0xf]
        %v478 = vld [vmem:[%s6] sm:$0x1]
        %v479 = vpack.c.bf16 %v461, %v461
        %v481 = vperm.slane %v478, 0
        %v499 = vunpack.c.l.b16 %v462
        %v500 = vunpack.c.l.b16 %v463
        %v501 = vunpack.c.l.b16 %v464
        %v502 = vunpack.c.l.b16 %v465
        %v503 = vunpack.c.l.b16 %v466
        %v504 = vunpack.c.l.b16 %v467
        %v505 = vunpack.c.l.b16 %v468
        %v506 = vunpack.c.l.b16 %v469
        %v507 = vunpack.c.l.b16 %v470
        %v508 = vunpack.c.l.b16 %v471
        %v509 = vunpack.c.l.b16 %v472
        %v510 = vunpack.c.l.b16 %v473
        %v511 = vunpack.c.l.b16 %v474
        %v512 = vunpack.c.l.b16 %v475
        %v513 = vunpack.c.l.b16 %v476
        %v514 = vunpack.c.l.b16 %v477
        %v515 = vpack.c.b16 %v500, %v499
        %v516 = vpack.c.b16 %v502, %v501
        %v517 = vpack.c.b16 %v504, %v503
        %v518 = vpack.c.b16 %v506, %v505
        %v519 = vpack.c.b16 %v508, %v507
        %v520 = vpack.c.b16 %v510, %v509
        %v521 = vpack.c.b16 %v512, %v511
        %v522 = vpack.c.b16 %v514, %v513
        %531 = vmatpush.bf16.msra.mxu0 %v522
        %532 = vmatpush.bf16.msra.mxu0 %v521
        %533 = vmatpush.bf16.msra.mxu0 %v520
        %534 = vmatpush.bf16.msra.mxu0 %v519
        %535 = vmatpush.bf16.msra.mxu0 %v518
        %536 = vmatpush.bf16.msra.mxu0 %v517
        %537 = vmatpush.bf16.msra.mxu0 %v516
        %538 = vmatpush.bf16.msra.mxu0 %v515
        %539 = vmatmul.bf16.gmra.mxu0 %v479
        %v540 = vpop.f32.mrf.mxu0
        %v541 = vadd.f32 %v481, %v540
        %v542 = vpop.f32.mrf.mxu0
        %543 = vdwg.mxu0
        %544 = vst [vmem:[%s345] sm:$0xff] %v541
        %s545 = sand.u32 %s186, 1
        %s546 = scalar_lea.sflag [#allocation4], %s545
        %s547 = sand.u32 %s186, 1
        %s548 = smul.addr %s547, 8
        %s549 = scalar_lea.vmem [#allocation10], %s548
        // Predicated region
        $region65: #{tpu_custom_call.1} parent=47 // pred_check
          %p550 = pneg %p196
        $region66: #{tpu_custom_call.1} parent=47 // pred_check_branch
          %552 = sbr.rel (%p550) target = $region68
        $region67: #{tpu_custom_call.1} parent=47 // pred_region
          %554 = vsyncadd %s546, 0
          %s555 = smul.addr %s26, 8
          %s556 = scalar_lea.hbm %s7, %s555
          %s558 = sshll.u32 %s549, 4
          %s559 = int_to_ptr.vmem [resolvable:$true] %s558
          %s560 = sshll.u32 %s556, 4
          %s561 = int_to_ptr.hbm [resolvable:$true] %s560
          %563 = dma.vmem_to_hbm [thread:$0]  %s559, 128, %s561, %s546
        $region68: #{tpu_custom_call.1} parent=47 // pred_fallthru
          _
      $region48: #{tpu_custom_call.1} parent=5 // pred_fallthru
        _
      %p564 = scmp.le.s32.totalorder 2, %s21
      // Predicated region
      $region69: #{tpu_custom_call.1} parent=5 // pred_check
        %p565 = pneg %p564
      $region70: #{tpu_custom_call.1} parent=5 // pred_check_branch
        %567 = sbr.rel (%p565) target = $region72
      $region71: #{tpu_custom_call.1} parent=5 // pred_region
        %s568 = ssub.s32 %s21, 2
        // Predicated region
        $region73: #{tpu_custom_call.1} parent=71 // pred_check
          %p569 = pneg %p202
        $region74: #{tpu_custom_call.1} parent=71 // pred_check_branch
          %571 = sbr.rel (%p569) target = $region76
        $region75: #{tpu_custom_call.1} parent=71 // pred_region
          %s572 = sand.u32 %s187, 1
          %s573 = scalar_lea.sflag [#allocation4], %s572
          %s574 = sand.u32 %s187, 1
          %s575 = smul.addr %s574, 8
          %s576 = scalar_lea.vmem [#allocation10], %s575
          %578 = dma.done %s573, 128
        $region76: #{tpu_custom_call.1} parent=71 // pred_fallthru
          _
      $region72: #{tpu_custom_call.1} parent=5 // pred_fallthru
        _
    $region6: #{tpu_custom_call.1} parent=1 // loop_footer
      %s25 = sadd.s32 1, %s21
    $region7: #{tpu_custom_call.1} parent=1 // loop_footer_branch
      %20 = sbr.rel target = $region3
    $region8: #{tpu_custom_call.1} parent=1 // loop_exit
      _
    %579 = vsyncpa [#allocation3], 1
    %s580 = scalar_lea.sflag [#allocation3], 1
    %581 = vsyncpa %s580, 1
    %582 = vsyncpa [#allocation6], 1
    %583 = vsyncpa [#allocation9], 1
    %584 = vsyncpa [#allocation4], 1
    %s585 = scalar_lea.sflag [#allocation4], 1
    %586 = vsyncpa %s585, 1

</llo_original>
